<compile_context>
chip_gen: v7x
topology: tpu7x:2x2x1
jax: 0.10.0
libtpu: 0.0.40
codegen_flags: <defaults>
</compile_context>

<pallas_src>
import functools
import math

import jax
import jax.numpy as jnp
from jax.experimental import pallas as pl
from jax.experimental.pallas import tpu as pltpu

BN_EPS = 1e-5
MIB = 1024 * 1024

# Full-size EssenceNet configuration: (kernel, stride, pad, mid_ch, out_ch).
FULL_CFG = dict(
    img=256,
    num_classes=10,
    feat_ch=2048,
    blocks=[
        (256, 256, 0, 4096, 2048),
        (128, 128, 0, 2048, 1024),
        (64,  64,  0, 1024, 512),
        (32,  32,  0, 512,  256),
        (16,  16,  0, 256,  128),
        (8,   8,   0, 128,  64),
        (4,   4,   0, 64,   32),
        (3,   2,   1, 32,   16),
    ],
)

# Scaled-down config with the same structure, used by the __main__ smoke test
# (the full model streams ~650 MB of bf16 weights per forward).  Exercises both
# kernel paths (block 0 streams, the rest fuse) plus the fused reduction+head.
DEMO_CFG = dict(
    img=64,
    num_classes=10,
    feat_ch=256,
    blocks=[
        (64, 64, 0, 512, 256),
        (32, 32, 0, 128, 64),
        (16, 16, 0, 64,  32),
        (8,  8,  0, 32,  32),
        (3,  2,  1, 32,  16),
    ],
)

# Blocks whose (w1 + w2) weights total at most this many bytes run as a single
# fused two-matmul kernel (all weights VMEM resident, one launch).
FUSE_MAX_WEIGHT_BYTES = 2 * MIB


def _round_up(x, m):
    return ((x + m - 1) // m) * m


@functools.lru_cache(maxsize=None)
def _hw_config():
    """Generation-aware tiling knobs.

    v7x    : 64 MiB VMEM / TensorCore, 2 TCs -> keep >=2 lane-dense output (j)
             tiles so the "parallel" axis shards across cores; big weight tiles.
    v5e/v6e: 128 MiB VMEM, 1 TC -> full-width (tk, N) weight tiles (contiguous
             HBM reads, fewer grid steps) and a 64 MiB scoped-VMEM limit.
    unknown: conservative 32 MiB limit / 8 MiB tiles.
    """
    vmem = None
    kind = ""
    try:
        vmem = int(pltpu.get_tpu_info().vmem_capacity_bytes)
    except Exception:
        pass
    try:
        kind = jax.devices()[0].device_kind.lower()
    except Exception:
        pass
    multicore = ("v7" in kind) or (vmem is not None and vmem <= 100 * MIB)
    if multicore:
        limit, budget = 44 * MIB, 16 * MIB
    elif vmem is not None:
        limit, budget = 64 * MIB, 16 * MIB
    else:
        limit, budget = 32 * MIB, 8 * MIB
    if vmem is not None:  # degrade gracefully on small-VMEM parts
        limit = min(limit, vmem * 3 // 4)
        budget = min(budget, max(MIB, limit // 4))
    return dict(multicore=multicore, tile_budget=budget, tn_max=1024,
                vmem_limit=limit)


def _pick_tn(n, hw):
    """Output-column tile.  Multicore (v7x): >=2 lane-dense tiles so the
    'parallel' j axis splits across TensorCores.  Single-core (v5e/v6e): the
    full width N -> each (tk, N) weight tile is one contiguous HBM range."""
    if not hw["multicore"]:
        return n
    if n % 128 != 0 or n < 256:
        return n
    cap = min(hw["tn_max"], n // 2)
    best, d = 128, 128
    while d <= cap:
        if n % d == 0:
            best = d
        d += 128
    return best


def _pick_tk(kp, tn, budget_bytes, itemsize=2):
    """Largest multiple-of-128 divisor of kp with tk * tn * itemsize <= budget."""
    assert kp % 128 == 0
    m = kp // 128
    cap = max(1, min(m, budget_bytes // (tn * itemsize * 128)))
    best = 1
    for d in range(1, cap + 1):
        if m % d == 0:
            best = d
    return best * 128


# ---------------------------------------------------------------------------
# Pallas kernel 1: RGB -> grayscale (weighted channel reduction)
# ---------------------------------------------------------------------------
def _gray_kernel(x_ref, o_ref):
    # x_ref: (3, H, W), o_ref: (H, W)
    o_ref[...] = 0.299 * x_ref[0] + 0.587 * x_ref[1] + 0.114 * x_ref[2]


def rgb_to_gray(x):
    B, C, H, W = x.shape
    return pl.pallas_call(
        _gray_kernel,
        out_shape=jax.ShapeDtypeStruct((B, H, W), jnp.float32),
        grid_spec=pltpu.PrefetchScalarGridSpec(
            num_scalar_prefetch=0,
            grid=(B,),
            in_specs=[pl.BlockSpec((None, 3, H, W), lambda b: (b, 0, 0, 0))],
            out_specs=pl.BlockSpec((None, H, W), lambda b: (b, 0, 0)),
        ),
        compiler_params=pltpu.CompilerParams(dimension_semantics=("parallel",)),
    )(x)


# ---------------------------------------------------------------------------
# Pallas kernel 2: weight-streaming  y = act((x @ w) * scale + shift)
# ---------------------------------------------------------------------------
def _linear_bn_act_kernel(x_ref, w_ref, s_ref, t_ref, o_ref, acc_ref,
                          *, block_k, apply_silu):
    k = pl.program_id(1)

    @pl.when(k == 0)
    def _():
        acc_ref[...] = jnp.zeros_like(acc_ref)

    off = pl.multiple_of(k * block_k, 128)
    xk = x_ref[:, pl.ds(off, block_k)]           # already bf16 (cast once in wrapper)
    acc_ref[...] += jnp.dot(xk, w_ref[...], preferred_element_type=jnp.float32)

    @pl.when(k == pl.num_programs(1) - 1)
    def _():
        y = acc_ref[...] * s_ref[...] + t_ref[...]
        if apply_silu:
            y = y * jax.nn.sigmoid(y)
        o_ref[...] = y.astype(o_ref.dtype)


def linear_bn_act(x, w, scale, shift, *, apply_silu=True):
    """x: (B, K), w: (Kp, N) bf16 (Kp >= K, zero rows beyond K), scale/shift: (N,)."""
    B, K = x.shape
    Kp, N = w.shape
    assert Kp >= K
    if Kp % 128 != 0:
        # Robustness guard only; never hit by the shipped configs (pre-padded at init).
        new_kp = _round_up(Kp, 128)
        w = jnp.pad(w, ((0, new_kp - Kp), (0, 0)))
        Kp = new_kp
    x = x.astype(w.dtype)                        # cast the activation row to bf16 ONCE
    if Kp != K:
        x = jnp.pad(x, ((0, 0), (0, Kp - K)))
    hw = _hw_config()
    tn = _pick_tn(N, hw)
    tk = _pick_tk(Kp, tn, hw["tile_budget"], itemsize=jnp.dtype(w.dtype).itemsize)
    grid = (N // tn, Kp // tk)
    kernel = functools.partial(_linear_bn_act_kernel, block_k=tk,
                               apply_silu=apply_silu)
    wbytes = int(w.size) * jnp.dtype(w.dtype).itemsize
    cost = pl.CostEstimate(
        flops=2 * B * Kp * N,
        transcendentals=B * N if apply_silu else 0,
        bytes_accessed=int(wbytes + x.size * 2 + B * N * 4 + 2 * N * 4),
    )
    return pl.pallas_call(
        kernel,
        out_shape=jax.ShapeDtypeStruct((B, N), jnp.float32),
        grid_spec=pltpu.PrefetchScalarGridSpec(
            num_scalar_prefetch=0,
            grid=grid,
            in_specs=[
                pl.BlockSpec((B, Kp), lambda j, k: (0, 0)),          # x: VMEM resident
                pl.BlockSpec((tk, tn), lambda j, k: (k, j)),          # weight stream
                pl.BlockSpec((1, tn), lambda j, k: (0, j)),
                pl.BlockSpec((1, tn), lambda j, k: (0, j)),
            ],
            out_specs=pl.BlockSpec((B, tn), lambda j, k: (0, j)),
            scratch_shapes=[pltpu.VMEM((B, tn), jnp.float32)],
        ),
        compiler_params=pltpu.CompilerParams(
            dimension_semantics=("parallel", "arbitrary"),
            vmem_limit_bytes=hw["vmem_limit"]),
        cost_estimate=cost,
    )(x, w, scale.reshape(1, N), shift.reshape(1, N))


# ---------------------------------------------------------------------------
# Pallas kernel 3: channel_reduction + classifier head fused into one launch
# ---------------------------------------------------------------------------
def _reduction_head_kernel(x_ref, wr_ref, sr_ref, tr_ref,
                           wh1_ref, sh1_ref, th1_ref,
                           wh2_ref, sh2_ref, th2_ref,
                           o_ref, acc_ref, hacc_ref, *, block_k):
    j = pl.program_id(0)
    k = pl.program_id(1)
    last_j = pl.num_programs(0) - 1
    last_k = pl.num_programs(1) - 1

    @pl.when(jnp.logical_and(j == 0, k == 0))
    def _():
        hacc_ref[...] = jnp.zeros_like(hacc_ref)

    @pl.when(k == 0)
    def _():
        acc_ref[...] = jnp.zeros_like(acc_ref)

    off = pl.multiple_of(k * block_k, 128)
    xk = x_ref[:, pl.ds(off, block_k)]
    acc_ref[...] += jnp.dot(xk, wr_ref[...], preferred_element_type=jnp.float32)

    @pl.when(k == last_k)
    def _():
        red = acc_ref[...] * sr_ref[...] + tr_ref[...]
        red = red * jax.nn.sigmoid(red)                            # SiLU
        # head conv1: accumulate this feat_ch slice's contribution
        hacc_ref[...] += jnp.dot(red, wh1_ref[...],
                                 preferred_element_type=jnp.float32)

    @pl.when(jnp.logical_and(j == last_j, k == last_k))
    def _():
        h = hacc_ref[...] * sh1_ref[...] + th1_ref[...]
        h = h * jax.nn.sigmoid(h)
        y = jnp.dot(h, wh2_ref[...], preferred_element_type=jnp.float32)
        o_ref[...] = y * sh2_ref[...] + th2_ref[...]


def channel_reduction_head(pyr, wr, sr, tr, wh1, sh1, th1, wh2, sh2, th2):
    """SiLU(BN(pyr @ wr)) streamed, with the head (1x1 conv+BN+SiLU, 1x1 conv+bias)
    fused into the epilogue; the (B, feat_ch) intermediate never leaves VMEM."""
    B, Kr = pyr.shape
    Krp, F = wr.shape
    _, Hp = wh1.shape
    Hp2, nc = wh2.shape
    assert Hp == Hp2 and Krp % 128 == 0 and Hp % 128 == 0
    x = pyr.astype(wr.dtype)
    if Krp != Kr:
        x = jnp.pad(x, ((0, 0), (0, Krp - Kr)))
    hw = _hw_config()
    tn = _pick_tn(F, hw)
    tk = _pick_tk(Krp, tn, hw["tile_budget"], itemsize=jnp.dtype(wr.dtype).itemsize)
    grid = (F // tn, Krp // tk)
    kernel = functools.partial(_reduction_head_kernel, block_k=tk)
    cost = pl.CostEstimate(
        flops=2 * B * (Krp * F + F * Hp + Hp * nc),
        transcendentals=B * (F + Hp),
        bytes_accessed=int(wr.size * 2 + wh1.size * 4 + wh2.size * 4
                           + x.size * 2 + B * nc * 4),
    )
    return pl.pallas_call(
        kernel,
        out_shape=jax.ShapeDtypeStruct((B, nc), jnp.float32),
        grid_spec=pltpu.PrefetchScalarGridSpec(
            num_scalar_prefetch=0,
            grid=grid,
            in_specs=[
                pl.BlockSpec((B, Krp), lambda j, k: (0, 0)),      # pyramid row, resident
                pl.BlockSpec((tk, tn), lambda j, k: (k, j)),      # wr stream
                pl.BlockSpec((1, tn), lambda j, k: (0, j)),       # sr
                pl.BlockSpec((1, tn), lambda j, k: (0, j)),       # tr
                pl.BlockSpec((tn, Hp), lambda j, k: (j, 0)),      # wh1 slice
                pl.BlockSpec((1, Hp), lambda j, k: (0, 0)),       # sh1
                pl.BlockSpec((1, Hp), lambda j, k: (0, 0)),       # th1
                pl.BlockSpec((Hp, nc), lambda j, k: (0, 0)),      # wh2 (resident)
                pl.BlockSpec((1, nc), lambda j, k: (0, 0)),       # sh2
                pl.BlockSpec((1, nc), lambda j, k: (0, 0)),       # th2
            ],
            out_specs=pl.BlockSpec((B, nc), lambda j, k: (0, 0)),
            scratch_shapes=[pltpu.VMEM((B, tn), jnp.float32),     # reduction accumulator
                            pltpu.VMEM((B, Hp), jnp.float32)],    # head hidden accumulator
        ),
        compiler_params=pltpu.CompilerParams(
            # j carries the head accumulation -> must stay sequential
            dimension_semantics=("arbitrary", "arbitrary"),
            vmem_limit_bytes=hw["vmem_limit"]),
        cost_estimate=cost,
    )(x, wr, sr.reshape(1, F), tr.reshape(1, F),
      wh1, sh1.reshape(1, Hp), th1.reshape(1, Hp),
      wh2, sh2.reshape(1, nc), th2.reshape(1, nc))


# ---------------------------------------------------------------------------
# Pallas kernel 4: fused small pyramid block (two matmuls + BN + SiLU, 1 launch)
# ---------------------------------------------------------------------------
def _fused_block_kernel(x_ref, w1_ref, s1_ref, t1_ref, w2_ref, s2_ref, t2_ref,
                        o_ref, *, apply_silu2):
    h = jnp.dot(x_ref[...].astype(w1_ref.dtype), w1_ref[...],
                preferred_element_type=jnp.float32)
    h = h * s1_ref[...] + t1_ref[...]
    h = h * jax.nn.sigmoid(h)
    y = jnp.dot(h.astype(w2_ref.dtype), w2_ref[...],
                preferred_element_type=jnp.float32)
    y = y * s2_ref[...] + t2_ref[...]
    if apply_silu2:
        y = y * jax.nn.sigmoid(y)
    o_ref[...] = y


def fused_block(x, w1, s1, t1, w2, s2, t2, *, apply_silu2=True):
    B, K = x.shape
    Kp, mid = w1.shape
    _, N = w2.shape
    if Kp != K:
        x = jnp.pad(x, ((0, 0), (0, Kp - K)))
    kernel = functools.partial(_fused_block_kernel, apply_silu2=apply_silu2)
    return pl.pallas_call(
        kernel,
        out_shape=jax.ShapeDtypeStruct((B, N), jnp.float32),
    )(x, w1, s1.reshape(1, mid), t1.reshape(1, mid),
      w2, s2.reshape(1, N), t2.reshape(1, N))


# ---------------------------------------------------------------------------
# Deterministic synthetic parameters (shapes from the module's __init__)
# ---------------------------------------------------------------------------
def _init_bn(key, n):
    kg, kb, km, kv = jax.random.split(key, 4)
    gamma = 1.0 + 0.1 * jax.random.normal(kg, (n,), jnp.float32)
    beta = 0.1 * jax.random.normal(kb, (n,), jnp.float32)
    mean = 0.1 * jax.random.normal(km, (n,), jnp.float32)
    var = jax.random.uniform(kv, (n,), jnp.float32, 0.5, 1.5)
    return gamma, beta, mean, var


def _fold_bn(bn, bias=None):
    # Inference BN folded onto the preceding linear: (z - mean)/sqrt(var+eps)*g + b
    gamma, beta, mean, var = bn
    s = gamma / jnp.sqrt(var + BN_EPS)
    b = bias if bias is not None else 0.0
    t = beta + (b - mean) * s
    return s, t


def init_params(key, cfg, *, weight_dtype=jnp.bfloat16):
    itemsize = jnp.dtype(weight_dtype).itemsize
    params = {"blocks": []}
    for (ks, st, pd, mid, out) in cfg["blocks"]:
        K = ks * ks                         # Conv2d(1, mid, ks) flattened patch size
        Kp = _round_up(K, 128)              # pad K ONCE here (not per forward call)
        key, k1, k2, kb1, kb2 = jax.random.split(key, 5)
        w1 = jax.random.normal(k1, (K, mid), jnp.float32) / math.sqrt(K)
        if Kp != K:
            w1 = jnp.pad(w1, ((0, Kp - K), (0, 0)))
        w2 = jax.random.normal(k2, (mid, out), jnp.float32) / math.sqrt(mid)
        streamed = (K * mid + mid * out) * itemsize > FUSE_MAX_WEIGHT_BYTES
        if streamed:                        # streamed blocks need a 128-aligned K dim
            midp = _round_up(mid, 128)
            if midp != mid:
                w2 = jnp.pad(w2, ((0, midp - mid), (0, 0)))
        s1, t1 = _fold_bn(_init_bn(kb1, mid))
        s2, t2 = _fold_bn(_init_bn(kb2, out))
        params["blocks"].append(dict(
            w1=w1.astype(weight_dtype), s1=s1, t1=t1,
            w2=w2.astype(weight_dtype), s2=s2, t2=t2))

    total_ch = sum(3 + out for (_, _, _, _, out) in cfg["blocks"])
    Kr = total_ch
    Krp = _round_up(Kr, 128)
    key, kr, kbr = jax.random.split(key, 3)
    wr = jax.random.normal(kr, (Kr, cfg["feat_ch"]), jnp.float32) / math.sqrt(Kr)
    if Krp != Kr:
        wr = jnp.pad(wr, ((0, Krp - Kr), (0, 0)))
    params["wr"] = wr.astype(weight_dtype)
    params["sr"], params["tr"] = _fold_bn(_init_bn(kbr, cfg["feat_ch"]))

    nc = cfg["num_classes"]
    hidden = 2 * nc
    Hp = _round_up(hidden, 128)             # lane-aligned hidden dim (zero-padded)
    key, kh1, kh1b, kbh1, kh2, kh2b = jax.random.split(key, 6)
    wh1 = (jax.random.normal(kh1, (cfg["feat_ch"], hidden), jnp.float32)
           / math.sqrt(cfg["feat_ch"]))
    bh1 = 0.1 * jax.random.normal(kh1b, (hidden,), jnp.float32)
    sh1, th1 = _fold_bn(_init_bn(kbh1, hidden), bias=bh1)
    wh2 = (jax.random.normal(kh2, (hidden, nc), jnp.float32) / math.sqrt(hidden))
    bh2 = 0.1 * jax.random.normal(kh2b, (nc,), jnp.float32)
    params["wh1"] = jnp.pad(wh1, ((0, 0), (0, Hp - hidden)))       # tiny: keep f32
    params["sh1"] = jnp.pad(sh1, (0, Hp - hidden), constant_values=1.0)
    params["th1"] = jnp.pad(th1, (0, Hp - hidden))
    params["wh2"] = jnp.pad(wh2, ((0, Hp - hidden), (0, 0)))
    params["sh2"] = jnp.ones((nc,), jnp.float32)   # no BN after the last head conv
    params["th2"] = bh2                            # its bias
    return params


def _fits_fused(p):
    nbytes = (int(p["w1"].size) * jnp.dtype(p["w1"].dtype).itemsize
              + int(p["w2"].size) * jnp.dtype(p["w2"].dtype).itemsize)
    return nbytes <= FUSE_MAX_WEIGHT_BYTES


# ---------------------------------------------------------------------------
# Forward pass (EssenceNet backbone + classifier head)
# ---------------------------------------------------------------------------
def essencenet_classifier_forward(params, x, cfg):
    img = cfg["img"]
    assert x.shape[1] == 3 and x.shape[2] == x.shape[3] == img
    B = x.shape[0]
    gray = rgb_to_gray(x)                                    # (B, img, img)  Pallas

    feats = []
    for i, (ks, st, pd, mid, out) in enumerate(cfg["blocks"]):
        out_size = (img + 2 * pd - ks) // st + 1
        blk = img // out_size
        # F.interpolate(color, size, mode='area') pixel [0,0] == top-left block mean
        color = jnp.mean(x[:, :, :blk, :blk], axis=(2, 3))   # (B, 3)  plain-JAX glue
        if pd == 0:
            # kernel_size == stride, pad 0: output [0,0] = linear(top-left ks x ks patch)
            patch = gray[:, :ks, :ks].reshape(B, ks * ks)
        else:
            # ks=3, s=2, p=1: output [0,0] sees a zero-padded 3x3 window
            z = jnp.zeros((B,), jnp.float32)
            patch = jnp.stack(
                [z, z, z,
                 z, gray[:, 0, 0], gray[:, 0, 1],
                 z, gray[:, 1, 0], gray[:, 1, 1]], axis=1)   # (B, 9)
        p = params["blocks"][i]
        if _fits_fused(p):
            # small block: Conv+BN+SiLU (+DropBlock identity) +Conv1x1+BN+SiLU, 1 launch
            # TODO(synk): the small fused blocks could be packed into one grid with
            # scalar-prefetch weight offsets to save a few more launches.
            h = fused_block(patch, p["w1"], p["s1"], p["t1"],
                            p["w2"], p["s2"], p["t2"], apply_silu2=True)
        else:
            # big block: weight-streaming kernel per conv
            h = linear_bn_act(patch, p["w1"], p["s1"], p["t1"], apply_silu=True)
            h = linear_bn_act(h, p["w2"], p["s2"], p["t2"], apply_silu=True)
        feats.append(color)   # torch.cat([resized_color, k_feat], dim=1)
        feats.append(h)

    pyr = jnp.concatenate(feats, axis=1)                     # (B, total_ch)
    # channel_reduction (Conv1x1+BN+SiLU) with the classifier head fused into
    # the epilogue: area-resize to (1,1) is identity, Dropout is eval identity.
    logits = channel_reduction_head(
        pyr, params["wr"], params["sr"], params["tr"],
        params["wh1"], params["sh1"], params["th1"],
        params["wh2"], params["sh2"], params["th2"])
    return logits                                            # (B, num_classes)


if __name__ == "__main__":
    cfg = DEMO_CFG   # FULL_CFG reproduces the exact PyTorch module sizes
    key = jax.random.PRNGKey(0)
    kp, kx = jax.random.split(key)
    params = init_params(kp, cfg)
    x = jax.random.normal(kx, (2, 3, cfg["img"], cfg["img"]), jnp.float32)

    # --- numerical check 1: streaming linear + BN + SiLU ----------------------
    k1, k2, k3, k4, k5 = jax.random.split(jax.random.PRNGKey(1), 5)
    xa = jax.random.normal(k1, (2, 384), jnp.float32)
    wa = (jax.random.normal(k2, (384, 256), jnp.float32) / 384 ** 0.5
          ).astype(jnp.bfloat16)
    sa = 1.0 + 0.1 * jax.random.normal(k3, (256,), jnp.float32)
    ta = 0.1 * jax.random.normal(k4, (256,), jnp.float32)
    got = linear_bn_act(xa, wa, sa, ta, apply_silu=True)
    z = jnp.dot(xa.astype(jnp.bfloat16), wa,
                preferred_element_type=jnp.float32) * sa + ta
    ref = z * jax.nn.sigmoid(z)
    assert jnp.allclose(got, ref, atol=2e-2, rtol=2e-2), "linear_bn_act mismatch"

    # --- numerical check 2: fused small block ---------------------------------
    wb = (jax.random.normal(k5, (256, 64), jnp.float32) / 16.0).astype(jnp.bfloat16)
    got2 = fused_block(xa, wa, sa, ta, wb,
                       jnp.ones((64,), jnp.float32), jnp.zeros((64,), jnp.float32),
                       apply_silu2=False)
    ref2 = jnp.dot(ref.astype(jnp.bfloat16), wb, preferred_element_type=jnp.float32)
    assert jnp.allclose(got2, ref2, atol=5e-2, rtol=5e-2), "fused_block mismatch"

    # --- numerical check 3: fused channel-reduction + classifier head ---------
    kk = jax.random.split(jax.random.PRNGKey(2), 8)
    Kr, Fc, nc = 200, 256, 10
    hid = 2 * nc
    Hp = _round_up(hid, 128)
    pyr_t = jax.random.normal(kk[0], (2, Kr), jnp.float32)
    wr_t = (jax.random.normal(kk[1], (Kr, Fc), jnp.float32) / Kr ** 0.5
            ).astype(jnp.bfloat16)
    wr_t = jnp.pad(wr_t, ((0, _round_up(Kr, 128) - Kr), (0, 0)))
    sr_t = 1.0 + 0.1 * jax.random.normal(kk[2], (Fc,), jnp.float32)
    tr_t = 0.1 * jax.random.normal(kk[3], (Fc,), jnp.float32)
    wh1_t = jnp.pad(jax.random.normal(kk[4], (Fc, hid), jnp.float32) / Fc ** 0.5,
                    ((0, 0), (0, Hp - hid)))
    sh1_t = jnp.pad(1.0 + 0.1 * jax.random.normal(kk[5], (hid,), jnp.float32),
                    (0, Hp - hid), constant_values=1.0)
    th1_t = jnp.pad(0.1 * jax.random.normal(kk[6], (hid,), jnp.float32),
                    (0, Hp - hid))
    wh2_t = jnp.pad(jax.random.normal(kk[7], (hid, nc), jnp.float32) / hid ** 0.5,
                    ((0, Hp - hid), (0, 0)))
    sh2_t = jnp.ones((nc,), jnp.float32)
    th2_t = jnp.zeros((nc,), jnp.float32)
    got3 = channel_reduction_head(pyr_t, wr_t, sr_t, tr_t,
                                  wh1_t, sh1_t, th1_t, wh2_t, sh2_t, th2_t)
    xb = jnp.pad(pyr_t.astype(jnp.bfloat16), ((0, 0), (0, wr_t.shape[0] - Kr)))
    zr = jnp.dot(xb, wr_t, preferred_element_type=jnp.float32) * sr_t + tr_t
    red = zr * jax.nn.sigmoid(zr)
    zh = jnp.dot(red, wh1_t) * sh1_t + th1_t
    hh = zh * jax.nn.sigmoid(zh)
    ref3 = jnp.dot(hh, wh2_t) * sh2_t + th2_t
    assert jnp.allclose(got3, ref3, atol=5e-2, rtol=5e-2), \
        "channel_reduction_head mismatch"

    # --- full forward ----------------------------------------------------------
    fwd = jax.jit(functools.partial(essencenet_classifier_forward, cfg=cfg))
    logits = fwd(params, x)
    jax.block_until_ready(logits)
    assert logits.shape == (2, cfg["num_classes"])
    assert bool(jnp.all(jnp.isfinite(logits)))
    print("KERNEL_OK")
</pallas_src>

<mosaic_0001>
module attributes {stable_mosaic.version = 11 : i64} {
  func.func @_linear_bn_act_kernel(%arg0: i32, %arg1: i32, %arg2: memref<2x384xbf16, #tpu.memory_space<vmem>>, %arg3: memref<384x256xbf16, #tpu.memory_space<vmem>>, %arg4: memref<1x256xf32, #tpu.memory_space<vmem>>, %arg5: memref<1x256xf32, #tpu.memory_space<vmem>>, %arg6: memref<2x256xf32, #tpu.memory_space<vmem>>, %arg7: memref<2x256xf32, #tpu.memory_space<vmem>>) attributes {dimension_semantics = [#tpu.dimension_semantics<parallel>, #tpu.dimension_semantics<arbitrary>], iteration_bounds = array<i64: 1, 1>, scalar_prefetch = 0 : i64, scratch_operands = 1 : i64, tpu.core_type = #tpu.core_type<tc>, window_params = [{pipeline_mode = #tpu.pipeline_mode<synchronous>, transform_indices = @transform_0, window_bounds = array<i64: 2, 384>}, {transform_indices = @transform_1, window_bounds = array<i64: 384, 256>}, {transform_indices = @transform_2, window_bounds = array<i64: 1, 256>}, {transform_indices = @transform_3, window_bounds = array<i64: 1, 256>}, {transform_indices = @transform_4, window_bounds = array<i64: 2, 256>}]} {
    %c0_i32 = arith.constant 0 : i32
    %0 = arith.cmpi eq, %arg1, %c0_i32 : i32
    %1 = arith.extui %0 : i1 to i32
    %c0_i32_0 = arith.constant 0 : i32
    %2 = arith.cmpi ne, %1, %c0_i32_0 : i32
    scf.if %2 {
      %cst_9 = arith.constant 0.000000e+00 : f32
      %15 = vector.broadcast %cst_9 : f32 to vector<2x256xf32>
      %c0_10 = arith.constant 0 : index
      %c0_11 = arith.constant 0 : index
      %16 = vector.load %arg7[%c0_10, %c0_11] : memref<2x256xf32, #tpu.memory_space<vmem>>, vector<2x256xf32>
      tpu.vector_store %arg7[%c0_10, %c0_11], %15 {strides = array<i32>} : memref<2x256xf32, #tpu.memory_space<vmem>>, vector<2x256xf32>,
    } else {
    }
    %c384_i32 = arith.constant 384 : i32
    %3 = arith.muli %arg1, %c384_i32 : i32
    %4 = tpu.assume_multiple %3, 128 : i32
    %c0 = arith.constant 0 : index
    %5 = arith.index_cast %4 : i32 to index
    %6 = vector.load %arg2[%c0, %5] : memref<2x384xbf16, #tpu.memory_space<vmem>>, vector<2x384xbf16>
    %c0_1 = arith.constant 0 : index
    %c0_2 = arith.constant 0 : index
    %7 = vector.load %arg7[%c0_1, %c0_2] : memref<2x256xf32, #tpu.memory_space<vmem>>, vector<2x256xf32>
    %c0_3 = arith.constant 0 : index
    %c0_4 = arith.constant 0 : index
    %8 = vector.load %arg3[%c0_3, %c0_4] : memref<384x256xbf16, #tpu.memory_space<vmem>>, vector<384x256xbf16>
    %cst = arith.constant dense<0.000000e+00> : vector<2x256xf32>
    %9 = tpu.matmul %6, %8, %cst {dimension_numbers = #tpu.dot_dimension_numbers<[1], [0], [0], [1], [0, 0, 1, 1], [], []>} : vector<2x384xbf16>, vector<384x256xbf16>, vector<2x256xf32> -> vector<2x256xf32>
    %10 = arith.addf %7, %9 : vector<2x256xf32>
    %c0_5 = arith.constant 0 : index
    %c0_6 = arith.constant 0 : index
    %11 = vector.load %arg7[%c0_5, %c0_6] : memref<2x256xf32, #tpu.memory_space<vmem>>, vector<2x256xf32>
    tpu.vector_store %arg7[%c0_5, %c0_6], %10 {strides = array<i32>} : memref<2x256xf32, #tpu.memory_space<vmem>>, vector<2x256xf32>,
    %c0_i32_7 = arith.constant 0 : i32
    %12 = arith.cmpi eq, %arg1, %c0_i32_7 : i32
    %13 = arith.extui %12 : i1 to i32
    %c0_i32_8 = arith.constant 0 : i32
    %14 = arith.cmpi ne, %13, %c0_i32_8 : i32
    scf.if %14 {
      %c0_9 = arith.constant 0 : index
      %c0_10 = arith.constant 0 : index
      %15 = vector.load %arg7[%c0_9, %c0_10] : memref<2x256xf32, #tpu.memory_space<vmem>>, vector<2x256xf32>
      %c0_11 = arith.constant 0 : index
      %c0_12 = arith.constant 0 : index
      %16 = vector.load %arg4[%c0_11, %c0_12] : memref<1x256xf32, #tpu.memory_space<vmem>>, vector<1x256xf32>
      %17 = vector.broadcast %16 : vector<1x256xf32> to vector<2x256xf32>
      %18 = arith.mulf %15, %17 : vector<2x256xf32>
      %c0_13 = arith.constant 0 : index
      %c0_14 = arith.constant 0 : index
      %19 = vector.load %arg5[%c0_13, %c0_14] : memref<1x256xf32, #tpu.memory_space<vmem>>, vector<1x256xf32>
      %20 = vector.broadcast %19 : vector<1x256xf32> to vector<2x256xf32>
      %21 = arith.addf %18, %20 : vector<2x256xf32>
      %22 = arith.negf %21 : vector<2x256xf32>
      %23 = math.exp %22 : vector<2x256xf32>
      %cst_15 = arith.constant 1.000000e+00 : f32
      %24 = vector.broadcast %cst_15 : f32 to vector<2x256xf32>
      %25 = arith.addf %24, %23 : vector<2x256xf32>
      %26 = arith.divf %24, %25 : vector<2x256xf32>
      %27 = arith.mulf %21, %26 : vector<2x256xf32>
      %c0_16 = arith.constant 0 : index
      %c0_17 = arith.constant 0 : index
      %28 = vector.load %arg6[%c0_16, %c0_17] : memref<2x256xf32, #tpu.memory_space<vmem>>, vector<2x256xf32>
      tpu.vector_store %arg6[%c0_16, %c0_17], %27 {strides = array<i32>} : memref<2x256xf32, #tpu.memory_space<vmem>>, vector<2x256xf32>,
    } else {
    }
    return
  }
  func.func @transform_0(%arg0: i32, %arg1: i32) -> (i32, i32) {
    %c0_i32 = arith.constant 0 : i32
    %c0_i32_0 = arith.constant 0 : i32
    %c0_i32_1 = arith.constant 0 : i32
    return %c0_i32, %c0_i32_0 : i32, i32
  }
  func.func @transform_1(%arg0: i32, %arg1: i32) -> (i32, i32) {
    %c0_i32 = arith.constant 0 : i32
    return %arg1, %arg0 : i32, i32
  }
  func.func @transform_2(%arg0: i32, %arg1: i32) -> (i32, i32) {
    %c0_i32 = arith.constant 0 : i32
    %c0_i32_0 = arith.constant 0 : i32
    return %c0_i32, %arg0 : i32, i32
  }
  func.func @transform_3(%arg0: i32, %arg1: i32) -> (i32, i32) {
    %c0_i32 = arith.constant 0 : i32
    %c0_i32_0 = arith.constant 0 : i32
    return %c0_i32, %arg0 : i32, i32
  }
  func.func @transform_4(%arg0: i32, %arg1: i32) -> (i32, i32) {
    %c0_i32 = arith.constant 0 : i32
    %c0_i32_0 = arith.constant 0 : i32
    return %c0_i32, %arg0 : i32, i32
  }
}

</mosaic_0001>

<llo_original>
// kernel: tpu_custom_call.1
$region0: #{tpu_custom_call.1}
  #allocation0 [shape = 'u32[]', space=smem, size = 0x4, offset = 0x4, fixed_abs, tag = 'smem constant byte address 0x4 - core index']
  #allocation1 [shape = 'u32[144,128]{1,0:T(1,128)}', space=vmem, size = 0x12000, scoped, tag = 'internal scratch']
  #allocation2 [shape = 'f32[2,256]{1,0:T(2,128)}', space=vmem, size = 0x800, scoped, tag = 'scratch operand']
  %s0 = inlined_call_operand.hbm [shape: bf16[2,384], index: 0, kind: input, shape index: {}]
  %s1 = inlined_call_operand.hbm [shape: bf16[384,256], index: 1, kind: input, shape index: {}]
  %s2 = inlined_call_operand.vmem [shape: f32[1,256], index: 2, kind: input, shape index: {}]
  %s3 = inlined_call_operand.vmem [shape: f32[1,256], index: 3, kind: input, shape index: {}]
  %s4 = inlined_call_operand.hbm [shape: f32[2,256], index: 4, kind: output, shape index: {}]
  %s5 = sld [smem:[#allocation0]]
  $region42: #{tpu_custom_call.1} parent=0
    _
  %s7 = ssub.s32 1, %s5
  %s8 = scalar_select 0, %s7, %s5
  $region1: #{tpu_custom_call.1} parent=0
    #allocation3 [shape = 'u8[1536]{0}', space=vmem, size = 0x800, scoped, tag = 'input window, operand 0, single buffered']
    #allocation4 [shape = 's32[1]{0}', space=sflag, size = 0x4, scoped, tag = 'scoped memory for tpu_custom_call.1']
    #allocation5 [shape = 's32[1]{0}', space=sflag, size = 0x4, scoped, tag = 'scoped memory for tpu_custom_call.1']
    #allocation6 [shape = 'u8[196608]{0}', space=vmem, size = 0x30000, scoped, tag = 'input window, operand 1, single buffered']
    #allocation7 [shape = 's32[1]{0}', space=sflag, size = 0x4, scoped, tag = 'scoped memory for tpu_custom_call.1']
    #allocation8 [shape = 'u8[2048]{0}', space=vmem, size = 0x800, scoped, tag = 'output window, operand 0, single buffered']
    %9 = vsyncpa [#allocation4], 0
    %10 = vsyncpa [#allocation7], 0
    %11 = vsyncpa [#allocation5], 0
    // Predicated region
    $region2: #{tpu_custom_call.1} parent=1 // pred_check
      _
    $region3: #{tpu_custom_call.1} parent=1 // pred_check_branch
      %13 = sbr.rel (0) target = $region5
    $region4: #{tpu_custom_call.1} parent=1 // pred_region
      %s15 = ssub.s32 48, 48
      %16 = vsyncadd [#allocation4], %s15
      %s18 = sshll.u32 [#allocation3], 4
      %s19 = int_to_ptr.vmem [resolvable:$true] %s18
      %21 = dma.hbm_to_vmem [thread:$0]  %s0, 48, %s19, [#allocation4]
    $region5: #{tpu_custom_call.1} parent=1 // pred_fallthru
      _
    // Predicated region
    $region6: #{tpu_custom_call.1} parent=1 // pred_check
      _
    $region7: #{tpu_custom_call.1} parent=1 // pred_check_branch
      %23 = sbr.rel (0) target = $region9
    $region8: #{tpu_custom_call.1} parent=1 // pred_region
      %s25 = ssub.s32 6144, 6144
      %26 = vsyncadd [#allocation7], %s25
      %s27 = sshll.u32 [#allocation6], 4
      %s28 = int_to_ptr.vmem [resolvable:$true] %s27
      %33 = dma.hbm_to_vmem [thread:$0]  %s1, 6144, %s28, [#allocation7], 128, 128, 8
    $region9: #{tpu_custom_call.1} parent=1 // pred_fallthru
      _
    // Predicated region
    $region10: #{tpu_custom_call.1} parent=1 // pred_check
      _
    $region11: #{tpu_custom_call.1} parent=1 // pred_check_branch
      %35 = sbr.rel (0) target = $region13
    $region12: #{tpu_custom_call.1} parent=1 // pred_region
      _
    $region13: #{tpu_custom_call.1} parent=1 // pred_fallthru
      _
    // Predicated region
    $region14: #{tpu_custom_call.1} parent=1 // pred_check
      _
    $region15: #{tpu_custom_call.1} parent=1 // pred_check_branch
      %37 = sbr.rel (0) target = $region17
    $region16: #{tpu_custom_call.1} parent=1 // pred_region
      _
    $region17: #{tpu_custom_call.1} parent=1 // pred_fallthru
      _
    // Predicated region
    $region18: #{tpu_custom_call.1} parent=1 // pred_check
      _
    $region19: #{tpu_custom_call.1} parent=1 // pred_check_branch
      %39 = sbr.rel (0) target = $region21
    $region20: #{tpu_custom_call.1} parent=1 // pred_region
      %40 = dma.done [#allocation4], 48
    $region21: #{tpu_custom_call.1} parent=1 // pred_fallthru
      _
    // Predicated region
    $region22: #{tpu_custom_call.1} parent=1 // pred_check
      _
    $region23: #{tpu_custom_call.1} parent=1 // pred_check_branch
      %42 = sbr.rel (0) target = $region25
    $region24: #{tpu_custom_call.1} parent=1 // pred_region
      %43 = dma.done [#allocation7], 6144
    $region25: #{tpu_custom_call.1} parent=1 // pred_fallthru
      _
    %p45 = scmp.eq.s32.totalorder 0, 0
    // Predicated region
    $region26: #{tpu_custom_call.1} parent=1 // pred_check
      %p46 = pneg %p45
    $region27: #{tpu_custom_call.1} parent=1 // pred_check_branch
      %48 = sbr.rel (%p46) target = $region29
    $region28: #{tpu_custom_call.1} parent=1 // pred_region
      %49 = vst [vmem:[#allocation2] sm:$0xf] 0.0
    $region29: #{tpu_custom_call.1} parent=1 // pred_fallthru
      _
    %s50 = smul.u32 0, 384
    %s51 = sshra.s32 %s50, 7
    %s52 = sand.u32 %s50, 127
    %s53 = scalar_lea.vmem [#allocation3], %s51
    %v54 = vld [vmem:[%s53] sm:$0x7]
    %v55 = vld [vmem:[#allocation2] sm:$0xf]
    %v56 = vld [vmem:[#allocation6] sm:$0xff]
    %v57 = vld [vmem:[#allocation6 + $0x8] sm:$0xff]
    %v58 = vld [vmem:[#allocation6 + $0x10] sm:$0xff]
    %v59 = vld [vmem:[#allocation6 + $0x18] sm:$0xff]
    %v60 = vld [vmem:[#allocation6 + $0x20] sm:$0xff]
    %v61 = vld [vmem:[#allocation6 + $0x28] sm:$0xff]
    %v62 = vld [vmem:[#allocation6 + $0x30] sm:$0xff]
    %v63 = vld [vmem:[#allocation6 + $0x38] sm:$0xff]
    %v64 = vld [vmem:[#allocation6 + $0x40] sm:$0xff]
    %v65 = vld [vmem:[#allocation6 + $0x48] sm:$0xff]
    %v66 = vld [vmem:[#allocation6 + $0x50] sm:$0xff]
    %v67 = vld [vmem:[#allocation6 + $0x58] sm:$0xff]
    %v68 = vld [vmem:[#allocation6 + $0x60] sm:$0xff]
    %v69 = vld [vmem:[#allocation6 + $0x68] sm:$0xff]
    %v70 = vld [vmem:[#allocation6 + $0x70] sm:$0xff]
    %v71 = vld [vmem:[#allocation6 + $0x78] sm:$0xff]
    %v72 = vld [vmem:[#allocation6 + $0x80] sm:$0xff]
    %v73 = vld [vmem:[#allocation6 + $0x88] sm:$0xff]
    %v74 = vld [vmem:[#allocation6 + $0x90] sm:$0xff]
    %v75 = vld [vmem:[#allocation6 + $0x98] sm:$0xff]
    %v76 = vld [vmem:[#allocation6 + $0xa0] sm:$0xff]
    %v77 = vld [vmem:[#allocation6 + $0xa8] sm:$0xff]
    %v78 = vld [vmem:[#allocation6 + $0xb0] sm:$0xff]
    %v79 = vld [vmem:[#allocation6 + $0xb8] sm:$0xff]
    %v80 = vld [vmem:[#allocation6 + $0xc0] sm:$0xff]
    %v81 = vld [vmem:[#allocation6 + $0xc8] sm:$0xff]
    %v82 = vld [vmem:[#allocation6 + $0xd0] sm:$0xff]
    %v83 = vld [vmem:[#allocation6 + $0xd8] sm:$0xff]
    %v84 = vld [vmem:[#allocation6 + $0xe0] sm:$0xff]
    %v85 = vld [vmem:[#allocation6 + $0xe8] sm:$0xff]
    %v86 = vld [vmem:[#allocation6 + $0xf0] sm:$0xff]
    %v87 = vld [vmem:[#allocation6 + $0xf8] sm:$0xff]
    %v88 = vld [vmem:[#allocation6 + $0x100] sm:$0xff]
    %v89 = vld [vmem:[#allocation6 + $0x108] sm:$0xff]
    %v90 = vld [vmem:[#allocation6 + $0x110] sm:$0xff]
    %v91 = vld [vmem:[#allocation6 + $0x118] sm:$0xff]
    %v92 = vld [vmem:[#allocation6 + $0x120] sm:$0xff]
    %v93 = vld [vmem:[#allocation6 + $0x128] sm:$0xff]
    %v94 = vld [vmem:[#allocation6 + $0x130] sm:$0xff]
    %v95 = vld [vmem:[#allocation6 + $0x138] sm:$0xff]
    %v96 = vld [vmem:[#allocation6 + $0x140] sm:$0xff]
    %v97 = vld [vmem:[#allocation6 + $0x148] sm:$0xff]
    %v98 = vld [vmem:[#allocation6 + $0x150] sm:$0xff]
    %v99 = vld [vmem:[#allocation6 + $0x158] sm:$0xff]
    %v100 = vld [vmem:[#allocation6 + $0x160] sm:$0xff]
    %v101 = vld [vmem:[#allocation6 + $0x168] sm:$0xff]
    %v102 = vld [vmem:[#allocation6 + $0x170] sm:$0xff]
    %v103 = vld [vmem:[#allocation6 + $0x178] sm:$0xff]
    %v106 = vunpack.c.l.s4 1966171168
    %v107 = vunpack.c.0.s8 %v106
    %v108 = vlaneseq
    %v109 = vshrl.u32 %v108, 7
    %v110 = vsub.s32 %v107, %v109
    %v111 = vrot.slane %v54, %v110
    %v112 = vcombine.high %v111, %v111
    %v114 = vunpack.c.l.s4 1966171168
    %v115 = vunpack.c.0.s8 %v114
    %v116 = vlaneseq
    %v117 = vshrl.u32 %v116, 7
    %v118 = vsub.s32 %v115, %v117
    %v119 = vrot.slane %v111, %v118
    %v121 = vunpack.c.l.s4 1966171168
    %v122 = vunpack.c.0.s8 %v121
    %v123 = vlaneseq
    %v124 = vshrl.u32 %v123, 7
    %v125 = vsub.s32 %v122, %v124
    %v126 = vrot.slane %v112, %v125
    %v127 = vcombine.high %v119, %v119
    %v179 = vunpack.c.l.b16 %v56
    %v180 = vunpack.c.h.b16 %v56
    %v181 = vunpack.c.l.b16 %v57
    %v182 = vunpack.c.h.b16 %v57
    %v183 = vunpack.c.l.b16 %v58
    %v184 = vunpack.c.h.b16 %v58
    %v185 = vunpack.c.l.b16 %v59
    %v186 = vunpack.c.h.b16 %v59
    %v187 = vunpack.c.l.b16 %v60
    %v188 = vunpack.c.h.b16 %v60
    %v189 = vunpack.c.l.b16 %v61
    %v190 = vunpack.c.h.b16 %v61
    %v191 = vunpack.c.l.b16 %v62
    %v192 = vunpack.c.h.b16 %v62
    %v193 = vunpack.c.l.b16 %v63
    %v194 = vunpack.c.h.b16 %v63
    %v195 = vunpack.c.l.b16 %v64
    %v196 = vunpack.c.h.b16 %v64
    %v197 = vunpack.c.l.b16 %v65
    %v198 = vunpack.c.h.b16 %v65
    %v199 = vunpack.c.l.b16 %v66
    %v200 = vunpack.c.h.b16 %v66
    %v201 = vunpack.c.l.b16 %v67
    %v202 = vunpack.c.h.b16 %v67
    %v203 = vunpack.c.l.b16 %v68
    %v204 = vunpack.c.h.b16 %v68
    %v205 = vunpack.c.l.b16 %v69
    %v206 = vunpack.c.h.b16 %v69
    %v207 = vunpack.c.l.b16 %v70
    %v208 = vunpack.c.h.b16 %v70
    %v209 = vunpack.c.l.b16 %v71
    %v210 = vunpack.c.h.b16 %v71
    %v211 = vunpack.c.l.b16 %v72
    %v212 = vunpack.c.h.b16 %v72
    %v213 = vunpack.c.l.b16 %v73
    %v214 = vunpack.c.h.b16 %v73
    %v215 = vunpack.c.l.b16 %v74
    %v216 = vunpack.c.h.b16 %v74
    %v217 = vunpack.c.l.b16 %v75
    %v218 = vunpack.c.h.b16 %v75
    %v219 = vunpack.c.l.b16 %v76
    %v220 = vunpack.c.h.b16 %v76
    %v221 = vunpack.c.l.b16 %v77
    %v222 = vunpack.c.h.b16 %v77
    %v223 = vunpack.c.l.b16 %v78
    %v224 = vunpack.c.h.b16 %v78
    %v225 = vunpack.c.l.b16 %v79
    %v226 = vunpack.c.h.b16 %v79
    %v227 = vunpack.c.l.b16 %v80
    %v228 = vunpack.c.h.b16 %v80
    %v229 = vunpack.c.l.b16 %v81
    %v230 = vunpack.c.h.b16 %v81
    %v231 = vunpack.c.l.b16 %v82
    %v232 = vunpack.c.h.b16 %v82
    %v233 = vunpack.c.l.b16 %v83
    %v234 = vunpack.c.h.b16 %v83
    %v235 = vunpack.c.l.b16 %v84
    %v236 = vunpack.c.h.b16 %v84
    %v237 = vunpack.c.l.b16 %v85
    %v238 = vunpack.c.h.b16 %v85
    %v239 = vunpack.c.l.b16 %v86
    %v240 = vunpack.c.h.b16 %v86
    %v241 = vunpack.c.l.b16 %v87
    %v242 = vunpack.c.h.b16 %v87
    %v243 = vunpack.c.l.b16 %v88
    %v244 = vunpack.c.h.b16 %v88
    %v245 = vunpack.c.l.b16 %v89
    %v246 = vunpack.c.h.b16 %v89
    %v247 = vunpack.c.l.b16 %v90
    %v248 = vunpack.c.h.b16 %v90
    %v249 = vunpack.c.l.b16 %v91
    %v250 = vunpack.c.h.b16 %v91
    %v251 = vunpack.c.l.b16 %v92
    %v252 = vunpack.c.h.b16 %v92
    %v253 = vunpack.c.l.b16 %v93
    %v254 = vunpack.c.h.b16 %v93
    %v255 = vunpack.c.l.b16 %v94
    %v256 = vunpack.c.h.b16 %v94
    %v257 = vunpack.c.l.b16 %v95
    %v258 = vunpack.c.h.b16 %v95
    %v259 = vunpack.c.l.b16 %v96
    %v260 = vunpack.c.h.b16 %v96
    %v261 = vunpack.c.l.b16 %v97
    %v262 = vunpack.c.h.b16 %v97
    %v263 = vunpack.c.l.b16 %v98
    %v264 = vunpack.c.h.b16 %v98
    %v265 = vunpack.c.l.b16 %v99
    %v266 = vunpack.c.h.b16 %v99
    %v267 = vunpack.c.l.b16 %v100
    %v268 = vunpack.c.h.b16 %v100
    %v269 = vunpack.c.l.b16 %v101
    %v270 = vunpack.c.h.b16 %v101
    %v271 = vunpack.c.l.b16 %v102
    %v272 = vunpack.c.h.b16 %v102
    %v273 = vunpack.c.l.b16 %v103
    %v274 = vunpack.c.h.b16 %v103
    %v275 = vpack.c.b16 %v181, %v179
    %v276 = vpack.c.b16 %v182, %v180
    %v277 = vpack.c.b16 %v185, %v183
    %v278 = vpack.c.b16 %v186, %v184
    %v279 = vpack.c.b16 %v189, %v187
    %v280 = vpack.c.b16 %v190, %v188
    %v281 = vpack.c.b16 %v193, %v191
    %v282 = vpack.c.b16 %v194, %v192
    %v283 = vpack.c.b16 %v197, %v195
    %v284 = vpack.c.b16 %v198, %v196
    %v285 = vpack.c.b16 %v201, %v199
    %v286 = vpack.c.b16 %v202, %v200
    %v287 = vpack.c.b16 %v205, %v203
    %v288 = vpack.c.b16 %v206, %v204
    %v289 = vpack.c.b16 %v209, %v207
    %v290 = vpack.c.b16 %v210, %v208
    %v291 = vpack.c.b16 %v213, %v211
    %v292 = vpack.c.b16 %v214, %v212
    %v293 = vpack.c.b16 %v217, %v215
    %v294 = vpack.c.b16 %v218, %v216
    %v295 = vpack.c.b16 %v221, %v219
    %v296 = vpack.c.b16 %v222, %v220
    %v297 = vpack.c.b16 %v225, %v223
    %v298 = vpack.c.b16 %v226, %v224
    %v299 = vpack.c.b16 %v229, %v227
    %v300 = vpack.c.b16 %v230, %v228
    %v301 = vpack.c.b16 %v233, %v231
    %v302 = vpack.c.b16 %v234, %v232
    %v303 = vpack.c.b16 %v237, %v235
    %v304 = vpack.c.b16 %v238, %v236
    %v305 = vpack.c.b16 %v241, %v239
    %v306 = vpack.c.b16 %v242, %v240
    %v307 = vpack.c.b16 %v245, %v243
    %v308 = vpack.c.b16 %v246, %v244
    %v309 = vpack.c.b16 %v249, %v247
    %v310 = vpack.c.b16 %v250, %v248
    %v311 = vpack.c.b16 %v253, %v251
    %v312 = vpack.c.b16 %v254, %v252
    %v313 = vpack.c.b16 %v257, %v255
    %v314 = vpack.c.b16 %v258, %v256
    %v315 = vpack.c.b16 %v261, %v259
    %v316 = vpack.c.b16 %v262, %v260
    %v317 = vpack.c.b16 %v265, %v263
    %v318 = vpack.c.b16 %v266, %v264
    %v319 = vpack.c.b16 %v269, %v267
    %v320 = vpack.c.b16 %v270, %v268
    %v321 = vpack.c.b16 %v273, %v271
    %v322 = vpack.c.b16 %v274, %v272
    %371 = vmatprep.subr.bf16.mxu0 %v276
    %372 = vmatpush1.bf16.msra.mxu0 %v275
    %373 = vmatprep.subr.bf16.mxu0 %v278
    %374 = vmatpush1.bf16.msra.mxu0 %v277
    %375 = vmatprep.subr.bf16.mxu0 %v280
    %376 = vmatpush1.bf16.msra.mxu0 %v279
    %377 = vmatprep.subr.bf16.mxu0 %v282
    %378 = vmatpush1.bf16.msra.mxu0 %v281
    %379 = vmatprep.subr.bf16.mxu0 %v284
    %380 = vmatpush1.bf16.msra.mxu0 %v283
    %381 = vmatprep.subr.bf16.mxu0 %v286
    %382 = vmatpush1.bf16.msra.mxu0 %v285
    %383 = vmatprep.subr.bf16.mxu0 %v288
    %384 = vmatpush1.bf16.msra.mxu0 %v287
    %385 = vmatprep.subr.bf16.mxu0 %v290
    %386 = vmatpush1.bf16.msra.mxu0 %v289
    %387 = vmatprep.subr.bf16.mxu0 %v292
    %388 = vmatpush1.bf16.msra.mxu0 %v291
    %389 = vmatprep.subr.bf16.mxu0 %v294
    %390 = vmatpush1.bf16.msra.mxu0 %v293
    %391 = vmatprep.subr.bf16.mxu0 %v296
    %392 = vmatpush1.bf16.msra.mxu0 %v295
    %393 = vmatprep.subr.bf16.mxu0 %v298
    %394 = vmatpush1.bf16.msra.mxu0 %v297
    %395 = vmatprep.subr.bf16.mxu0 %v300
    %396 = vmatpush1.bf16.msra.mxu0 %v299
    %397 = vmatprep.subr.bf16.mxu0 %v302
    %398 = vmatpush1.bf16.msra.mxu0 %v301
    %399 = vmatprep.subr.bf16.mxu0 %v304
    %400 = vmatpush1.bf16.msra.mxu0 %v303
    %401 = vmatprep.subr.bf16.mxu0 %v306
    %402 = vmatpush1.bf16.msra.mxu0 %v305
    %403 = vmatprep.mubr.bf16.mxu0 %v126
    %404 = vmatmul.mubr.bf16.gmra.mrb[0].mxu0 %v119
    %v405 = vpop.f32.mrb[0].mxu0
    %v406 = vadd.f32 0.0, %v405
    %v407 = vpop.f32.mrb[0].mxu0
    %v408 = vadd.f32 0.0, %v407
    %v409 = vpop.f32.mrb[0].mxu0
    %v410 = vpop.f32.mrb[0].mxu0
    %411 = vdwg.mxu0
    %412 = vmatprep.subr.bf16.mxu0 %v308
    %413 = vmatpush1.bf16.msra.mxu0 %v307
    %414 = vmatprep.subr.bf16.mxu0 %v310
    %415 = vmatpush1.bf16.msra.mxu0 %v309
    %416 = vmatprep.subr.bf16.mxu0 %v312
    %417 = vmatpush1.bf16.msra.mxu0 %v311
    %418 = vmatprep.subr.bf16.mxu0 %v314
    %419 = vmatpush1.bf16.msra.mxu0 %v313
    %420 = vmatprep.subr.bf16.mxu0 %v316
    %421 = vmatpush1.bf16.msra.mxu0 %v315
    %422 = vmatprep.subr.bf16.mxu0 %v318
    %423 = vmatpush1.bf16.msra.mxu0 %v317
    %424 = vmatprep.subr.bf16.mxu0 %v320
    %425 = vmatpush1.bf16.msra.mxu0 %v319
    %426 = vmatprep.subr.bf16.mxu0 %v322
    %427 = vmatpush1.bf16.msra.mxu0 %v321
    %428 = vmatprep.subr.bf16.mxu0 0
    %429 = vmatpush1.bf16.msra.mxu0 0
    %430 = vmatprep.subr.bf16.mxu0 0
    %431 = vmatpush1.bf16.msra.mxu0 0
    %432 = vmatprep.subr.bf16.mxu0 0
    %433 = vmatpush1.bf16.msra.mxu0 0
    %434 = vmatprep.subr.bf16.mxu0 0
    %435 = vmatpush1.bf16.msra.mxu0 0
    %436 = vmatprep.subr.bf16.mxu0 0
    %437 = vmatpush1.bf16.msra.mxu0 0
    %438 = vmatprep.subr.bf16.mxu0 0
    %439 = vmatpush1.bf16.msra.mxu0 0
    %440 = vmatprep.subr.bf16.mxu0 0
    %441 = vmatpush1.bf16.msra.mxu0 0
    %442 = vmatprep.subr.bf16.mxu0 0
    %443 = vmatpush1.bf16.msra.mxu0 0
    %444 = vmatprep.mubr.bf16.mxu0 0
    %445 = vmatmul.mubr.bf16.gmra.mrb[0].mxu0 %v127
    %v446 = vpop.f32.mrb[0].mxu0
    %v447 = vadd.f32 %v406, %v446
    %v448 = vpop.f32.mrb[0].mxu0
    %v449 = vadd.f32 %v408, %v448
    %v450 = vpop.f32.mrb[0].mxu0
    %v451 = vpop.f32.mrb[0].mxu0
    %452 = vdwg.mxu0
    %v455 = vcombine.low %v447, %v449
    %v457 = vunpack.c.l.s4 1983009808
    %v458 = vunpack.c.0.s8 %v457
    %v459 = vlaneseq
    %v460 = vshrl.u32 %v459, 7
    %v461 = vsub.s32 %v458, %v460
    %v462 = vrot.slane %v455, %v461
    %v464 = vadd.f32 %v55, %v462
    %465 = vst [vmem:[#allocation2] sm:$0xf] %v464
    // Predicated region
    $region30: #{tpu_custom_call.1} parent=1 // pred_check
      %p466 = pneg %p45
    $region31: #{tpu_custom_call.1} parent=1 // pred_check_branch
      %468 = sbr.rel (%p466) target = $region33
    $region32: #{tpu_custom_call.1} parent=1 // pred_region
      %v469 = vld [vmem:[#allocation2] sm:$0xf]
      %v470 = vld [vmem:[%s2] sm:$0x3]
      %v472 = vlaneseq
      %v473 = vshrl.u32 %v472, 7
      %v474 = vsub.s32 0, %v473
      %v475 = vrot.slane %v470, %v474
      %v476 = vlaneseq
      %v477 = vshrl.u32 %v476, 7
      %v478 = vsub.s32 1, %v477
      %v479 = vrot.slane %v470, %v478
      %v480 = vcombine.low %v475, %v479
      %v482 = vunpack.c.l.s4 1983009808
      %v483 = vunpack.c.0.s8 %v482
      %v484 = vlaneseq
      %v485 = vshrl.u32 %v484, 7
      %v486 = vsub.s32 %v483, %v485
      %v487 = vrot.slane %v480, %v486
      %v489 = vmul.f32 %v469, %v487
      %v490 = vld [vmem:[%s3] sm:$0x3]
      %v492 = vlaneseq
      %v493 = vshrl.u32 %v492, 7
      %v494 = vsub.s32 0, %v493
      %v495 = vrot.slane %v490, %v494
      %v496 = vlaneseq
      %v497 = vshrl.u32 %v496, 7
      %v498 = vsub.s32 1, %v497
      %v499 = vrot.slane %v490, %v498
      %v500 = vcombine.low %v495, %v499
      %v502 = vunpack.c.l.s4 1983009808
      %v503 = vunpack.c.0.s8 %v502
      %v504 = vlaneseq
      %v505 = vshrl.u32 %v504, 7
      %v506 = vsub.s32 %v503, %v505
      %v507 = vrot.slane %v500, %v506
      %v509 = vadd.f32 %v489, %v507
      %v510 = vxor.u32 %v509, 2147483648
      %v511 = vmul.f32 %v510, 1.442695
      %v512 = vpow.pop %v511
      %v513 = vadd.f32 %v512, 1.0
      %v514 = vrcp.pop %v513
      %v515 = vmul.f32 1.0, %v514
      %v516 = vmul.f32 %v509, %v515
      %517 = vst [vmem:[#allocation8] sm:$0xf] %v516
    $region33: #{tpu_custom_call.1} parent=1 // pred_fallthru
      _
    // Predicated region
    $region34: #{tpu_custom_call.1} parent=1 // pred_check
      _
    $region35: #{tpu_custom_call.1} parent=1 // pred_check_branch
      %519 = sbr.rel (0) target = $region37
    $region36: #{tpu_custom_call.1} parent=1 // pred_region
      %s521 = ssub.s32 64, 64
      %522 = vsyncadd [#allocation5], %s521
      %s524 = sshll.u32 [#allocation8], 4
      %s525 = int_to_ptr.vmem [resolvable:$true] %s524
      %527 = dma.vmem_to_hbm [thread:$0]  %s525, 64, %s4, [#allocation5]
    $region37: #{tpu_custom_call.1} parent=1 // pred_fallthru
      _
    // Predicated region
    $region38: #{tpu_custom_call.1} parent=1 // pred_check
      _
    $region39: #{tpu_custom_call.1} parent=1 // pred_check_branch
      %529 = sbr.rel (0) target = $region41
    $region40: #{tpu_custom_call.1} parent=1 // pred_region
      %530 = dma.done [#allocation5], 64
    $region41: #{tpu_custom_call.1} parent=1 // pred_fallthru
      _
    %531 = vsyncpa [#allocation4], 1
    %532 = vsyncpa [#allocation7], 1
    %533 = vsyncpa [#allocation5], 1

</llo_original>
